<compile_context>
chip_gen: v7x
topology: tpu7x:2x2x1
jax: 0.10.0
libtpu: 0.0.40
codegen_flags: <defaults>
</compile_context>

<pallas_src>
import functools
import math

import jax
import jax.numpy as jnp
from jax.experimental import pallas as pl
from jax.experimental.pallas import tpu as pltpu


def _attention_kernel(x_ref, segw_ref, segt_ref, b_ref, out_ref, *, r):
    """One node tile, single (online-softmax) pass over the graph axis.

    x_ref:    (G, TR, LANE)  LANE = r*H; r consecutive nodes packed along lanes
    segw_ref: (G, LANE, r)   seg[l, j] * w[g, l]  (weight folded into the MXU RHS)
    segt_ref: (r, LANE)      seg transposed; broadcasts (TR, r) -> (TR, LANE) via MXU
    b_ref:    (G, 1)         per-graph biases
    out_ref:  (TR, LANE)     packed, lane-dense output tile
    """
    G = x_ref.shape[0]
    b = b_ref[...].astype(jnp.float32)                 # (G, 1)
    if r > 1:
        segt = segt_ref[...].astype(jnp.float32)       # (r, LANE), loaded once

    def to_lanes(v):                                   # (TR, r) -> (TR, LANE)
        if r > 1:
            return jnp.dot(v, segt, preferred_element_type=jnp.float32)
        return v                                       # (TR, 1) broadcasts natively

    # g == 0: exp(s0 - m) == 1 exactly, so no rescale / lane broadcast needed.
    x0 = x_ref[0]                                      # native-dtype VMEM read
    m = jnp.dot(x0, segw_ref[0], preferred_element_type=jnp.float32) + b[0:1, :]   # (TR, r)
    denom = jnp.ones_like(m)                           # (TR, r)
    acc = x0.astype(jnp.float32)                       # (TR, LANE), f32 accumulator

    # Online softmax over the (unrolled, small) graph axis: one x read per graph.
    for g in range(1, G):
        x_g = x_ref[g]
        s = jnp.dot(x_g, segw_ref[g], preferred_element_type=jnp.float32) + b[g:g + 1, :]
        m_new = jnp.maximum(m, s)
        alpha = jnp.exp(m - m_new)                     # (TR, r) running rescale
        p = jnp.exp(s - m_new)                         # (TR, r)
        denom = alpha * denom + p
        acc = acc * to_lanes(alpha) + x_g * to_lanes(p)
        m = m_new

    inv = 1.0 / denom                                  # exact; narrow (TR, r), cheap
    out_ref[...] = (acc * to_lanes(inv)).astype(out_ref.dtype)


def attention_forward(x, w, b, *, block_rows=None,
                      vmem_limit_bytes=None, vmem_tile_budget=None):
    """x: (G, N, H), w: (G, H), b: (G, 1) -> (N, H). Matches Attention.attn_feature().

    Perf note: on bandwidth-bound v5e/v6e, pass x in bf16 (cast it where it is
    produced, not here); keep w and b in f32 -- the kernel accumulates in f32.
    """
    G, N, H = x.shape
    assert w.shape == (G, H) and b.shape == (G, 1)

    w32 = w.astype(jnp.float32)
    b32 = b.astype(jnp.float32)

    # --- lane packing: r consecutive nodes side by side on the 128-lane axis ---
    r = 128 // math.gcd(H, 128)
    if r > 16:
        # Degenerate H (e.g. 100): packing factor too large.  Pad the feature
        # dim up to a multiple of 128 so loads/stores stay lane-dense.
        # TODO(synk): this fallback materializes one padded copy of x in HBM.
        r = 1
        hk = ((H + 127) // 128) * 128
        x = jnp.pad(x, ((0, 0), (0, 0), (0, hk - H)))
        w32 = jnp.pad(w32, ((0, 0), (0, hk - H)))
    else:
        hk = H
    lane = r * hk

    # --- pad N only up to a multiple of r (usually a no-op; never to a tile) ---
    n_al = ((N + r - 1) // r) * r
    if n_al != N:
        # Zero-padded nodes give finite scores (= bias) and are sliced off below.
        x = jnp.pad(x, ((0, 0), (0, n_al - N), (0, 0)))
    rows = n_al // r

    # Free, row-major-compatible relayout: (G, N, H) -> (G, rows, r*H).
    xr = x.reshape(G, rows, lane)

    # --- one-time small inputs: weight folded into the segment matmul RHS ---
    node_of_lane = jnp.arange(lane) // hk                                        # (lane,)
    seg = (node_of_lane[:, None] == jnp.arange(r)[None, :]).astype(jnp.float32)  # (lane, r)
    seg_w = jnp.tile(w32, (1, r))[:, :, None] * seg[None, :, :]                  # (G, lane, r)
    seg_t = seg.T                                                                # (r, lane)

    # --- VMEM budgeting (accounts for lane-padded (TR, r) temporaries) ---
    try:
        phys_vmem = pltpu.get_tpu_info().vmem_capacity_bytes
    except Exception:  # pragma: no cover - conservative fallback
        phys_vmem = 128 * 1024 * 1024
    if vmem_limit_bytes is None:
        # ~44 MiB on v7x (64 MiB/TC physical), 64 MiB on v5e/v6e (128 MiB).
        vmem_limit_bytes = min(64 * 1024 * 1024, int(phys_vmem * 0.7))
    if vmem_tile_budget is None:
        vmem_tile_budget = min(24 * 1024 * 1024, vmem_limit_bytes // 2)

    itemsize = x.dtype.itemsize
    per_row = (2 * G * lane * itemsize      # x block, double buffered
               + 2 * lane * itemsize        # out block, double buffered
               + 3 * lane * 4               # acc + full-width f32 transients
               + 8 * 128 * 4)               # narrow (TR, r) temps, lane-padded to 128
    if block_rows is None:
        block_rows = vmem_tile_budget // per_row

    if rows <= 8:
        block_rows = rows                   # tiny: single full-extent block
    else:
        block_rows = max(8, (int(block_rows) // 8) * 8)      # sublane aligned
        block_rows = min(block_rows, 1024)                    # diminishing returns
        # Keep >= 2 grid tiles so the "parallel" node axis spans both v7x cores.
        block_rows = min(block_rows, ((pl.cdiv(rows, 2) + 7) // 8) * 8)
    num_tiles = pl.cdiv(rows, block_rows)   # ragged last tile handled by Pallas

    cost = pl.CostEstimate(
        flops=int(2 * G * rows * lane * r + 3 * G * rows * lane + 6 * G * rows * r),
        transcendentals=int(2 * max(G - 1, 0) * rows * r),
        bytes_accessed=int(G * rows * lane * itemsize + rows * lane * itemsize
                           + G * lane * r * 4 + r * lane * 4 + G * 4),
    )

    kernel = functools.partial(_attention_kernel, r=r)

    out_packed = pl.pallas_call(
        kernel,
        out_shape=jax.ShapeDtypeStruct((rows, lane), x.dtype),
        grid=(num_tiles,),
        in_specs=[
            pl.BlockSpec((G, block_rows, lane), lambda i: (0, i, 0)),
            # Constant block indices -> fetched once, not re-DMA'd per grid step.
            pl.BlockSpec((G, lane, r), lambda i: (0, 0, 0)),
            pl.BlockSpec((r, lane), lambda i: (0, 0)),
            pl.BlockSpec((G, 1), lambda i: (0, 0)),
        ],
        out_specs=pl.BlockSpec((block_rows, lane), lambda i: (i, 0)),
        compiler_params=pltpu.CompilerParams(
            dimension_semantics=("parallel",),   # node tiles shard across both v7x TCs
            vmem_limit_bytes=vmem_limit_bytes,
        ),
        cost_estimate=cost,
    )(xr, seg_w, seg_t, b32)

    # Free reshape back to node-major; drop any node / feature padding.
    return out_packed.reshape(rows * r, hk)[:N, :H]


def reference_forward(x, w, b):
    """Pure-JAX reference mirroring the PyTorch attn_feature()."""
    scores = jnp.einsum("gnh,gh->gn", x, w) + b                # (G, N)
    attn = jax.nn.softmax(scores, axis=0)                      # softmax over graphs per node
    return jnp.sum(x * attn[:, :, None], axis=0)               # (N, H)


if __name__ == "__main__":
    # Small shapes consistent with the module: nb_graphs=4, nb_nodes=16, hid_units=32.
    G, N, H = 4, 16, 32
    key = jax.random.PRNGKey(0)
    k_x, k_w, k_x2 = jax.random.split(key, 3)

    x = jax.random.normal(k_x, (G, N, H), dtype=jnp.float32)

    # weight_init(): xavier_normal_ for Linear(H, 1) -> std = sqrt(2/(H+1)); bias = 0.
    xavier_std = (2.0 / (H + 1)) ** 0.5
    w = xavier_std * jax.random.normal(k_w, (G, H), dtype=jnp.float32)
    b = jnp.zeros((G, 1), dtype=jnp.float32)

    out = jax.block_until_ready(attention_forward(x, w, b))
    ref = reference_forward(x, w, b)
    assert out.shape == (N, H)
    assert jnp.allclose(out, ref, atol=1e-4, rtol=1e-4), "Pallas kernel mismatch (aligned case)"

    # Ragged case: N not a multiple of the packing factor nor of the tile size,
    # exercising the no-full-pad / ragged-final-block path.
    N2 = 37
    x2 = jax.random.normal(k_x2, (G, N2, H), dtype=jnp.float32)
    out2 = jax.block_until_ready(attention_forward(x2, w, b))
    ref2 = reference_forward(x2, w, b)
    assert out2.shape == (N2, H)
    assert jnp.allclose(out2, ref2, atol=1e-4, rtol=1e-4), "Pallas kernel mismatch (ragged case)"

    print("KERNEL_OK")
</pallas_src>

<mosaic_0001>
module attributes {stable_mosaic.version = 11 : i64} {
  func.func @_attention_kernel(%arg0: i32, %arg1: memref<4x4x128xf32, #tpu.memory_space<vmem>>, %arg2: memref<4x128x4xf32, #tpu.memory_space<vmem>>, %arg3: memref<4x128xf32, #tpu.memory_space<vmem>>, %arg4: memref<4x1xf32, #tpu.memory_space<vmem>>, %arg5: memref<4x128xf32, #tpu.memory_space<vmem>>) attributes {dimension_semantics = [#tpu.dimension_semantics<parallel>], iteration_bounds = array<i64: 1>, scalar_prefetch = 0 : i64, scratch_operands = 0 : i64, tpu.core_type = #tpu.core_type<tc>, window_params = [{transform_indices = @transform_0, window_bounds = array<i64: 4, 4, 128>}, {pipeline_mode = #tpu.pipeline_mode<synchronous>, transform_indices = @transform_1, window_bounds = array<i64: 4, 128, 4>}, {pipeline_mode = #tpu.pipeline_mode<synchronous>, transform_indices = @transform_2, window_bounds = array<i64: 4, 128>}, {pipeline_mode = #tpu.pipeline_mode<synchronous>, transform_indices = @transform_3, window_bounds = array<i64: 4, 1>}, {transform_indices = @transform_4, window_bounds = array<i64: 4, 128>}]} {
    %c0 = arith.constant 0 : index
    %c0_0 = arith.constant 0 : index
    %0 = vector.load %arg4[%c0, %c0_0] : memref<4x1xf32, #tpu.memory_space<vmem>>, vector<4x1xf32>
    %c0_1 = arith.constant 0 : index
    %c0_2 = arith.constant 0 : index
    %1 = vector.load %arg3[%c0_1, %c0_2] : memref<4x128xf32, #tpu.memory_space<vmem>>, vector<4x128xf32>
    %c0_3 = arith.constant 0 : index
    %c0_4 = arith.constant 0 : index
    %c0_5 = arith.constant 0 : index
    %2 = vector.load %arg1[%c0_3, %c0_4, %c0_5] : memref<4x4x128xf32, #tpu.memory_space<vmem>>, vector<1x4x128xf32>
    %3 = vector.shape_cast %2 : vector<1x4x128xf32> to vector<4x128xf32>
    %c0_6 = arith.constant 0 : index
    %c0_7 = arith.constant 0 : index
    %c0_8 = arith.constant 0 : index
    %4 = vector.load %arg2[%c0_6, %c0_7, %c0_8] : memref<4x128x4xf32, #tpu.memory_space<vmem>>, vector<1x128x4xf32>
    %5 = vector.shape_cast %4 : vector<1x128x4xf32> to vector<128x4xf32>
    %cst = arith.constant dense<0.000000e+00> : vector<4x4xf32>
    %6 = tpu.matmul %3, %5, %cst {dimension_numbers = #tpu.dot_dimension_numbers<[1], [0], [0], [1], [0, 0, 1, 1], [], []>} : vector<4x128xf32>, vector<128x4xf32>, vector<4x4xf32> -> vector<4x4xf32>
    %7 = vector.extract_strided_slice %0 {offsets = [0, 0], sizes = [1, 1], strides = [1, 1]} : vector<4x1xf32> to vector<1x1xf32>
    %8 = vector.broadcast %7 : vector<1x1xf32> to vector<4x4xf32>
    %9 = arith.addf %6, %8 : vector<4x4xf32>
    %cst_9 = arith.constant 1.000000e+00 : f32
    %10 = vector.broadcast %cst_9 : f32 to vector<4x4xf32>
    %c1 = arith.constant 1 : index
    %c0_10 = arith.constant 0 : index
    %c0_11 = arith.constant 0 : index
    %11 = vector.load %arg1[%c1, %c0_10, %c0_11] : memref<4x4x128xf32, #tpu.memory_space<vmem>>, vector<1x4x128xf32>
    %12 = vector.shape_cast %11 : vector<1x4x128xf32> to vector<4x128xf32>
    %c1_12 = arith.constant 1 : index
    %c0_13 = arith.constant 0 : index
    %c0_14 = arith.constant 0 : index
    %13 = vector.load %arg2[%c1_12, %c0_13, %c0_14] : memref<4x128x4xf32, #tpu.memory_space<vmem>>, vector<1x128x4xf32>
    %14 = vector.shape_cast %13 : vector<1x128x4xf32> to vector<128x4xf32>
    %cst_15 = arith.constant dense<0.000000e+00> : vector<4x4xf32>
    %15 = tpu.matmul %12, %14, %cst_15 {dimension_numbers = #tpu.dot_dimension_numbers<[1], [0], [0], [1], [0, 0, 1, 1], [], []>} : vector<4x128xf32>, vector<128x4xf32>, vector<4x4xf32> -> vector<4x4xf32>
    %16 = vector.extract_strided_slice %0 {offsets = [1, 0], sizes = [1, 1], strides = [1, 1]} : vector<4x1xf32> to vector<1x1xf32>
    %17 = vector.broadcast %16 : vector<1x1xf32> to vector<4x4xf32>
    %18 = arith.addf %15, %17 : vector<4x4xf32>
    %19 = arith.maximumf %9, %18 : vector<4x4xf32>
    %20 = arith.subf %9, %19 : vector<4x4xf32>
    %21 = math.exp %20 : vector<4x4xf32>
    %22 = arith.subf %18, %19 : vector<4x4xf32>
    %23 = math.exp %22 : vector<4x4xf32>
    %24 = arith.mulf %21, %10 : vector<4x4xf32>
    %25 = arith.addf %24, %23 : vector<4x4xf32>
    %cst_16 = arith.constant dense<0.000000e+00> : vector<4x128xf32>
    %26 = tpu.matmul %21, %1, %cst_16 {dimension_numbers = #tpu.dot_dimension_numbers<[1], [0], [0], [1], [0, 0, 1, 1], [], []>} : vector<4x4xf32>, vector<4x128xf32>, vector<4x128xf32> -> vector<4x128xf32>
    %27 = arith.mulf %3, %26 : vector<4x128xf32>
    %cst_17 = arith.constant dense<0.000000e+00> : vector<4x128xf32>
    %28 = tpu.matmul %23, %1, %cst_17 {dimension_numbers = #tpu.dot_dimension_numbers<[1], [0], [0], [1], [0, 0, 1, 1], [], []>} : vector<4x4xf32>, vector<4x128xf32>, vector<4x128xf32> -> vector<4x128xf32>
    %29 = arith.mulf %12, %28 : vector<4x128xf32>
    %30 = arith.addf %27, %29 : vector<4x128xf32>
    %c2 = arith.constant 2 : index
    %c0_18 = arith.constant 0 : index
    %c0_19 = arith.constant 0 : index
    %31 = vector.load %arg1[%c2, %c0_18, %c0_19] : memref<4x4x128xf32, #tpu.memory_space<vmem>>, vector<1x4x128xf32>
    %32 = vector.shape_cast %31 : vector<1x4x128xf32> to vector<4x128xf32>
    %c2_20 = arith.constant 2 : index
    %c0_21 = arith.constant 0 : index
    %c0_22 = arith.constant 0 : index
    %33 = vector.load %arg2[%c2_20, %c0_21, %c0_22] : memref<4x128x4xf32, #tpu.memory_space<vmem>>, vector<1x128x4xf32>
    %34 = vector.shape_cast %33 : vector<1x128x4xf32> to vector<128x4xf32>
    %cst_23 = arith.constant dense<0.000000e+00> : vector<4x4xf32>
    %35 = tpu.matmul %32, %34, %cst_23 {dimension_numbers = #tpu.dot_dimension_numbers<[1], [0], [0], [1], [0, 0, 1, 1], [], []>} : vector<4x128xf32>, vector<128x4xf32>, vector<4x4xf32> -> vector<4x4xf32>
    %36 = vector.extract_strided_slice %0 {offsets = [2, 0], sizes = [1, 1], strides = [1, 1]} : vector<4x1xf32> to vector<1x1xf32>
    %37 = vector.broadcast %36 : vector<1x1xf32> to vector<4x4xf32>
    %38 = arith.addf %35, %37 : vector<4x4xf32>
    %39 = arith.maximumf %19, %38 : vector<4x4xf32>
    %40 = arith.subf %19, %39 : vector<4x4xf32>
    %41 = math.exp %40 : vector<4x4xf32>
    %42 = arith.subf %38, %39 : vector<4x4xf32>
    %43 = math.exp %42 : vector<4x4xf32>
    %44 = arith.mulf %41, %25 : vector<4x4xf32>
    %45 = arith.addf %44, %43 : vector<4x4xf32>
    %cst_24 = arith.constant dense<0.000000e+00> : vector<4x128xf32>
    %46 = tpu.matmul %41, %1, %cst_24 {dimension_numbers = #tpu.dot_dimension_numbers<[1], [0], [0], [1], [0, 0, 1, 1], [], []>} : vector<4x4xf32>, vector<4x128xf32>, vector<4x128xf32> -> vector<4x128xf32>
    %47 = arith.mulf %30, %46 : vector<4x128xf32>
    %cst_25 = arith.constant dense<0.000000e+00> : vector<4x128xf32>
    %48 = tpu.matmul %43, %1, %cst_25 {dimension_numbers = #tpu.dot_dimension_numbers<[1], [0], [0], [1], [0, 0, 1, 1], [], []>} : vector<4x4xf32>, vector<4x128xf32>, vector<4x128xf32> -> vector<4x128xf32>
    %49 = arith.mulf %32, %48 : vector<4x128xf32>
    %50 = arith.addf %47, %49 : vector<4x128xf32>
    %c3 = arith.constant 3 : index
    %c0_26 = arith.constant 0 : index
    %c0_27 = arith.constant 0 : index
    %51 = vector.load %arg1[%c3, %c0_26, %c0_27] : memref<4x4x128xf32, #tpu.memory_space<vmem>>, vector<1x4x128xf32>
    %52 = vector.shape_cast %51 : vector<1x4x128xf32> to vector<4x128xf32>
    %c3_28 = arith.constant 3 : index
    %c0_29 = arith.constant 0 : index
    %c0_30 = arith.constant 0 : index
    %53 = vector.load %arg2[%c3_28, %c0_29, %c0_30] : memref<4x128x4xf32, #tpu.memory_space<vmem>>, vector<1x128x4xf32>
    %54 = vector.shape_cast %53 : vector<1x128x4xf32> to vector<128x4xf32>
    %cst_31 = arith.constant dense<0.000000e+00> : vector<4x4xf32>
    %55 = tpu.matmul %52, %54, %cst_31 {dimension_numbers = #tpu.dot_dimension_numbers<[1], [0], [0], [1], [0, 0, 1, 1], [], []>} : vector<4x128xf32>, vector<128x4xf32>, vector<4x4xf32> -> vector<4x4xf32>
    %56 = vector.extract_strided_slice %0 {offsets = [3, 0], sizes = [1, 1], strides = [1, 1]} : vector<4x1xf32> to vector<1x1xf32>
    %57 = vector.broadcast %56 : vector<1x1xf32> to vector<4x4xf32>
    %58 = arith.addf %55, %57 : vector<4x4xf32>
    %59 = arith.maximumf %39, %58 : vector<4x4xf32>
    %60 = arith.subf %39, %59 : vector<4x4xf32>
    %61 = math.exp %60 : vector<4x4xf32>
    %62 = arith.subf %58, %59 : vector<4x4xf32>
    %63 = math.exp %62 : vector<4x4xf32>
    %64 = arith.mulf %61, %45 : vector<4x4xf32>
    %65 = arith.addf %64, %63 : vector<4x4xf32>
    %cst_32 = arith.constant dense<0.000000e+00> : vector<4x128xf32>
    %66 = tpu.matmul %61, %1, %cst_32 {dimension_numbers = #tpu.dot_dimension_numbers<[1], [0], [0], [1], [0, 0, 1, 1], [], []>} : vector<4x4xf32>, vector<4x128xf32>, vector<4x128xf32> -> vector<4x128xf32>
    %67 = arith.mulf %50, %66 : vector<4x128xf32>
    %cst_33 = arith.constant dense<0.000000e+00> : vector<4x128xf32>
    %68 = tpu.matmul %63, %1, %cst_33 {dimension_numbers = #tpu.dot_dimension_numbers<[1], [0], [0], [1], [0, 0, 1, 1], [], []>} : vector<4x4xf32>, vector<4x128xf32>, vector<4x128xf32> -> vector<4x128xf32>
    %69 = arith.mulf %52, %68 : vector<4x128xf32>
    %70 = arith.addf %67, %69 : vector<4x128xf32>
    %cst_34 = arith.constant 1.000000e+00 : f32
    %71 = vector.broadcast %cst_34 : f32 to vector<4x4xf32>
    %72 = arith.divf %71, %65 : vector<4x4xf32>
    %cst_35 = arith.constant dense<0.000000e+00> : vector<4x128xf32>
    %73 = tpu.matmul %72, %1, %cst_35 {dimension_numbers = #tpu.dot_dimension_numbers<[1], [0], [0], [1], [0, 0, 1, 1], [], []>} : vector<4x4xf32>, vector<4x128xf32>, vector<4x128xf32> -> vector<4x128xf32>
    %74 = arith.mulf %70, %73 : vector<4x128xf32>
    %c0_36 = arith.constant 0 : index
    %c0_37 = arith.constant 0 : index
    %75 = vector.load %arg5[%c0_36, %c0_37] : memref<4x128xf32, #tpu.memory_space<vmem>>, vector<4x128xf32>
    tpu.vector_store %arg5[%c0_36, %c0_37], %74 {strides = array<i32>} : memref<4x128xf32, #tpu.memory_space<vmem>>, vector<4x128xf32>,
    return
  }
  func.func @transform_0(%arg0: i32) -> (i32, i32, i32) {
    %c0_i32 = arith.constant 0 : i32
    %c0_i32_0 = arith.constant 0 : i32
    %c0_i32_1 = arith.constant 0 : i32
    return %c0_i32, %arg0, %c0_i32_0 : i32, i32, i32
  }
  func.func @transform_1(%arg0: i32) -> (i32, i32, i32) {
    %c0_i32 = arith.constant 0 : i32
    %c0_i32_0 = arith.constant 0 : i32
    %c0_i32_1 = arith.constant 0 : i32
    %c0_i32_2 = arith.constant 0 : i32
    return %c0_i32, %c0_i32_0, %c0_i32_1 : i32, i32, i32
  }
  func.func @transform_2(%arg0: i32) -> (i32, i32) {
    %c0_i32 = arith.constant 0 : i32
    %c0_i32_0 = arith.constant 0 : i32
    %c0_i32_1 = arith.constant 0 : i32
    return %c0_i32, %c0_i32_0 : i32, i32
  }
  func.func @transform_3(%arg0: i32) -> (i32, i32) {
    %c0_i32 = arith.constant 0 : i32
    %c0_i32_0 = arith.constant 0 : i32
    %c0_i32_1 = arith.constant 0 : i32
    return %c0_i32, %c0_i32_0 : i32, i32
  }
  func.func @transform_4(%arg0: i32) -> (i32, i32) {
    %c0_i32 = arith.constant 0 : i32
    %c0_i32_0 = arith.constant 0 : i32
    return %arg0, %c0_i32 : i32, i32
  }
}

</mosaic_0001>

<llo_original>
// kernel: tpu_custom_call.1
$region0: #{tpu_custom_call.1}
  #allocation0 [shape = 'u32[]', space=smem, size = 0x4, offset = 0x4, fixed_abs, tag = 'smem constant byte address 0x4 - core index']
  #allocation1 [shape = 'u32[144,128]{1,0:T(1,128)}', space=vmem, size = 0x12000, scoped, tag = 'internal scratch']
  %s0 = inlined_call_operand.hbm [shape: f32[4,4,128], index: 0, kind: input, shape index: {}]
  %s1 = inlined_call_operand.hbm [shape: f32[4,128,4], index: 1, kind: input, shape index: {}]
  %s2 = inlined_call_operand.hbm [shape: f32[4,128], index: 2, kind: input, shape index: {}]
  %s3 = inlined_call_operand.hbm [shape: f32[4,1], index: 3, kind: input, shape index: {}]
  %s4 = inlined_call_operand.hbm [shape: f32[4,128], index: 4, kind: output, shape index: {}]
  %s5 = sld [smem:[#allocation0]]
  $region42: #{tpu_custom_call.1} parent=0
    _
  %s7 = ssub.s32 1, %s5
  %s8 = scalar_select 0, %s7, %s5
  $region1: #{tpu_custom_call.1} parent=0
    #allocation2 [shape = 'u8[8192]{0}', space=vmem, size = 0x2000, scoped, tag = 'input window, operand 0, single buffered']
    #allocation3 [shape = 's32[1]{0}', space=sflag, size = 0x4, scoped, tag = 'scoped memory for tpu_custom_call.1']
    #allocation4 [shape = 's32[1]{0}', space=sflag, size = 0x4, scoped, tag = 'scoped memory for tpu_custom_call.1']
    #allocation5 [shape = 'u8[262144]{0}', space=vmem, size = 0x40000, scoped, tag = 'input window, operand 1, single buffered']
    #allocation6 [shape = 's32[1]{0}', space=sflag, size = 0x4, scoped, tag = 'scoped memory for tpu_custom_call.1']
    #allocation7 [shape = 'u8[2048]{0}', space=vmem, size = 0x800, scoped, tag = 'input window, operand 2, single buffered']
    #allocation8 [shape = 'u8[2048]{0}', space=vmem, size = 0x800, scoped, tag = 'input window, operand 3, single buffered']
    #allocation9 [shape = 's32[1]{0}', space=sflag, size = 0x4, scoped, tag = 'scoped memory for tpu_custom_call.1']
    #allocation10 [shape = 'u8[2048]{0}', space=vmem, size = 0x800, scoped, tag = 'output window, operand 0, single buffered']
    %9 = vsyncpa [#allocation3], 0
    %10 = vsyncpa [#allocation6], 0
    %11 = vsyncpa [#allocation9], 0
    %12 = vsyncpa [#allocation4], 0
    // Predicated region
    $region2: #{tpu_custom_call.1} parent=1 // pred_check
      _
    $region3: #{tpu_custom_call.1} parent=1 // pred_check_branch
      %14 = sbr.rel (0) target = $region5
    $region4: #{tpu_custom_call.1} parent=1 // pred_region
      %s16 = ssub.s32 256, 256
      %17 = vsyncadd [#allocation3], %s16
      %s18 = sshll.u32 [#allocation2], 4
      %s19 = int_to_ptr.vmem [resolvable:$true] %s18
      %24 = dma.hbm_to_vmem [thread:$0]  %s0, 256, %s19, [#allocation3], 64, 64, 4
    $region5: #{tpu_custom_call.1} parent=1 // pred_fallthru
      _
    // Predicated region
    $region6: #{tpu_custom_call.1} parent=1 // pred_check
      _
    $region7: #{tpu_custom_call.1} parent=1 // pred_check_branch
      %26 = sbr.rel (0) target = $region9
    $region8: #{tpu_custom_call.1} parent=1 // pred_region
      %s28 = ssub.s32 8192, 8192
      %29 = vsyncadd [#allocation6], %s28
      %s30 = sshll.u32 [#allocation5], 4
      %s31 = int_to_ptr.vmem [resolvable:$true] %s30
      %36 = dma.hbm_to_vmem [thread:$0]  %s1, 8192, %s31, [#allocation6], 128, 128, 8
    $region9: #{tpu_custom_call.1} parent=1 // pred_fallthru
      _
    // Predicated region
    $region10: #{tpu_custom_call.1} parent=1 // pred_check
      _
    $region11: #{tpu_custom_call.1} parent=1 // pred_check_branch
      %38 = sbr.rel (0) target = $region13
    $region12: #{tpu_custom_call.1} parent=1 // pred_region
      %s40 = ssub.s32 64, 64
      %41 = vsyncadd [#allocation6], %s40
      %s43 = sshll.u32 [#allocation7], 4
      %s44 = int_to_ptr.vmem [resolvable:$true] %s43
      %46 = dma.hbm_to_vmem [thread:$0]  %s2, 64, %s44, [#allocation6]
    $region13: #{tpu_custom_call.1} parent=1 // pred_fallthru
      _
    // Predicated region
    $region14: #{tpu_custom_call.1} parent=1 // pred_check
      _
    $region15: #{tpu_custom_call.1} parent=1 // pred_check_branch
      %48 = sbr.rel (0) target = $region17
    $region16: #{tpu_custom_call.1} parent=1 // pred_region
      %s50 = ssub.s32 64, 64
      %51 = vsyncadd [#allocation9], %s50
      %s53 = sshll.u32 [#allocation8], 4
      %s54 = int_to_ptr.vmem [resolvable:$true] %s53
      %56 = dma.hbm_to_vmem [thread:$0]  %s3, 64, %s54, [#allocation9]
    $region17: #{tpu_custom_call.1} parent=1 // pred_fallthru
      _
    // Predicated region
    $region18: #{tpu_custom_call.1} parent=1 // pred_check
      _
    $region19: #{tpu_custom_call.1} parent=1 // pred_check_branch
      %58 = sbr.rel (0) target = $region21
    $region20: #{tpu_custom_call.1} parent=1 // pred_region
      %59 = dma.done [#allocation3], 256
    $region21: #{tpu_custom_call.1} parent=1 // pred_fallthru
      _
    // Predicated region
    $region22: #{tpu_custom_call.1} parent=1 // pred_check
      _
    $region23: #{tpu_custom_call.1} parent=1 // pred_check_branch
      %61 = sbr.rel (0) target = $region25
    $region24: #{tpu_custom_call.1} parent=1 // pred_region
      %62 = dma.done [#allocation6], 8192
    $region25: #{tpu_custom_call.1} parent=1 // pred_fallthru
      _
    // Predicated region
    $region26: #{tpu_custom_call.1} parent=1 // pred_check
      _
    $region27: #{tpu_custom_call.1} parent=1 // pred_check_branch
      %64 = sbr.rel (0) target = $region29
    $region28: #{tpu_custom_call.1} parent=1 // pred_region
      %65 = dma.done [#allocation6], 64
    $region29: #{tpu_custom_call.1} parent=1 // pred_fallthru
      _
    // Predicated region
    $region30: #{tpu_custom_call.1} parent=1 // pred_check
      _
    $region31: #{tpu_custom_call.1} parent=1 // pred_check_branch
      %67 = sbr.rel (0) target = $region33
    $region32: #{tpu_custom_call.1} parent=1 // pred_region
      %68 = dma.done [#allocation9], 64
    $region33: #{tpu_custom_call.1} parent=1 // pred_fallthru
      _
    %v69 = vld [vmem:[#allocation8] sm:$0xf]
    %v70 = vld [vmem:[#allocation7] sm:$0xf]
    %v71 = vld [vmem:[#allocation2] sm:$0xf]
    %v72 = vld [vmem:[#allocation5] sm:$0xff]
    %v73 = vld [vmem:[#allocation5 + $0x8] sm:$0xff]
    %v74 = vld [vmem:[#allocation5 + $0x10] sm:$0xff]
    %v75 = vld [vmem:[#allocation5 + $0x18] sm:$0xff]
    %v76 = vld [vmem:[#allocation5 + $0x20] sm:$0xff]
    %v77 = vld [vmem:[#allocation5 + $0x28] sm:$0xff]
    %v78 = vld [vmem:[#allocation5 + $0x30] sm:$0xff]
    %v79 = vld [vmem:[#allocation5 + $0x38] sm:$0xff]
    %v80 = vld [vmem:[#allocation5 + $0x40] sm:$0xff]
    %v81 = vld [vmem:[#allocation5 + $0x48] sm:$0xff]
    %v82 = vld [vmem:[#allocation5 + $0x50] sm:$0xff]
    %v83 = vld [vmem:[#allocation5 + $0x58] sm:$0xff]
    %v84 = vld [vmem:[#allocation5 + $0x60] sm:$0xff]
    %v85 = vld [vmem:[#allocation5 + $0x68] sm:$0xff]
    %v86 = vld [vmem:[#allocation5 + $0x70] sm:$0xff]
    %v87 = vld [vmem:[#allocation5 + $0x78] sm:$0xff]
    %s89 = vtos %v69
    %v90 = vstv %s89
    %92 = vmatprep.subr.mxu0 0.0
    %93 = vmatpush1.msra.mxu0 %v72
    %94 = vmatprep.subr.mxu0 0.0
    %95 = vmatpush1.msra.mxu0 %v73
    %96 = vmatprep.subr.mxu0 0.0
    %97 = vmatpush1.msra.mxu0 %v74
    %98 = vmatprep.subr.mxu0 0.0
    %99 = vmatpush1.msra.mxu0 %v75
    %100 = vmatprep.subr.mxu0 0.0
    %101 = vmatpush1.msra.mxu0 %v76
    %102 = vmatprep.subr.mxu0 0.0
    %103 = vmatpush1.msra.mxu0 %v77
    %104 = vmatprep.subr.mxu0 0.0
    %105 = vmatpush1.msra.mxu0 %v78
    %106 = vmatprep.subr.mxu0 0.0
    %107 = vmatpush1.msra.mxu0 %v79
    %108 = vmatprep.subr.mxu0 0.0
    %109 = vmatpush1.msra.mxu0 %v80
    %110 = vmatprep.subr.mxu0 0.0
    %111 = vmatpush1.msra.mxu0 %v81
    %112 = vmatprep.subr.mxu0 0.0
    %113 = vmatpush1.msra.mxu0 %v82
    %114 = vmatprep.subr.mxu0 0.0
    %115 = vmatpush1.msra.mxu0 %v83
    %116 = vmatprep.subr.mxu0 0.0
    %117 = vmatpush1.msra.mxu0 %v84
    %118 = vmatprep.subr.mxu0 0.0
    %119 = vmatpush1.msra.mxu0 %v85
    %120 = vmatprep.subr.mxu0 0.0
    %121 = vmatpush1.msra.mxu0 %v86
    %122 = vmatprep.subr.mxu0 0.0
    %123 = vmatpush1.msra.mxu0 %v87
    %124 = vmatprep.subr.mxu0 0.0
    %125 = vmatpush1.msra.mxu0 0.0
    %126 = vmatprep.subr.mxu0 0.0
    %127 = vmatpush1.msra.mxu0 0.0
    %128 = vmatprep.subr.mxu0 0.0
    %129 = vmatpush1.msra.mxu0 0.0
    %130 = vmatprep.subr.mxu0 0.0
    %131 = vmatpush1.msra.mxu0 0.0
    %132 = vmatprep.subr.mxu0 0.0
    %133 = vmatpush1.msra.mxu0 0.0
    %134 = vmatprep.subr.mxu0 0.0
    %135 = vmatpush1.msra.mxu0 0.0
    %136 = vmatprep.subr.mxu0 0.0
    %137 = vmatpush1.msra.mxu0 0.0
    %138 = vmatprep.subr.mxu0 0.0
    %139 = vmatpush1.msra.mxu0 0.0
    %140 = vmatprep.subr.mxu0 0.0
    %141 = vmatpush1.msra.mxu0 0.0
    %142 = vmatprep.subr.mxu0 0.0
    %143 = vmatpush1.msra.mxu0 0.0
    %144 = vmatprep.subr.mxu0 0.0
    %145 = vmatpush1.msra.mxu0 0.0
    %146 = vmatprep.subr.mxu0 0.0
    %147 = vmatpush1.msra.mxu0 0.0
    %148 = vmatprep.subr.mxu0 0.0
    %149 = vmatpush1.msra.mxu0 0.0
    %150 = vmatprep.subr.mxu0 0.0
    %151 = vmatpush1.msra.mxu0 0.0
    %152 = vmatprep.subr.mxu0 0.0
    %153 = vmatpush1.msra.mxu0 0.0
    %154 = vmatprep.subr.mxu0 0.0
    %155 = vmatpush1.msra.mxu0 0.0
    %156 = vmatprep.mubr.f32.mxu0 0.0
    %157 = vmatmul.mubr.f32.gmra.mrb[0].mxu0 %v71
    %v158 = vpop.f32.mrb[0].mxu0
    %v159 = vadd.f32 %v90, %v158
    %v160 = vpop.f32.mrb[0].mxu0
    %161 = vdwg.mxu0
    %s162 = scalar_lea.vmem [#allocation2], 4
    %v163 = vld [vmem:[%s162] sm:$0xf]
    %s164 = scalar_lea.vmem [#allocation5], 128
    %v165 = vld [vmem:[%s164] sm:$0xff]
    %v166 = vld [vmem:[%s164 + $0x8] sm:$0xff]
    %v167 = vld [vmem:[%s164 + $0x10] sm:$0xff]
    %v168 = vld [vmem:[%s164 + $0x18] sm:$0xff]
    %v169 = vld [vmem:[%s164 + $0x20] sm:$0xff]
    %v170 = vld [vmem:[%s164 + $0x28] sm:$0xff]
    %v171 = vld [vmem:[%s164 + $0x30] sm:$0xff]
    %v172 = vld [vmem:[%s164 + $0x38] sm:$0xff]
    %v173 = vld [vmem:[%s164 + $0x40] sm:$0xff]
    %v174 = vld [vmem:[%s164 + $0x48] sm:$0xff]
    %v175 = vld [vmem:[%s164 + $0x50] sm:$0xff]
    %v176 = vld [vmem:[%s164 + $0x58] sm:$0xff]
    %v177 = vld [vmem:[%s164 + $0x60] sm:$0xff]
    %v178 = vld [vmem:[%s164 + $0x68] sm:$0xff]
    %v179 = vld [vmem:[%s164 + $0x70] sm:$0xff]
    %v180 = vld [vmem:[%s164 + $0x78] sm:$0xff]
    %v181 = vrot.slane %v69, 1
    %s182 = vtos %v181
    %v183 = vstv %s182
    %185 = vmatprep.subr.mxu0 0.0
    %186 = vmatpush1.msra.mxu0 %v165
    %187 = vmatprep.subr.mxu0 0.0
    %188 = vmatpush1.msra.mxu0 %v166
    %189 = vmatprep.subr.mxu0 0.0
    %190 = vmatpush1.msra.mxu0 %v167
    %191 = vmatprep.subr.mxu0 0.0
    %192 = vmatpush1.msra.mxu0 %v168
    %193 = vmatprep.subr.mxu0 0.0
    %194 = vmatpush1.msra.mxu0 %v169
    %195 = vmatprep.subr.mxu0 0.0
    %196 = vmatpush1.msra.mxu0 %v170
    %197 = vmatprep.subr.mxu0 0.0
    %198 = vmatpush1.msra.mxu0 %v171
    %199 = vmatprep.subr.mxu0 0.0
    %200 = vmatpush1.msra.mxu0 %v172
    %201 = vmatprep.subr.mxu0 0.0
    %202 = vmatpush1.msra.mxu0 %v173
    %203 = vmatprep.subr.mxu0 0.0
    %204 = vmatpush1.msra.mxu0 %v174
    %205 = vmatprep.subr.mxu0 0.0
    %206 = vmatpush1.msra.mxu0 %v175
    %207 = vmatprep.subr.mxu0 0.0
    %208 = vmatpush1.msra.mxu0 %v176
    %209 = vmatprep.subr.mxu0 0.0
    %210 = vmatpush1.msra.mxu0 %v177
    %211 = vmatprep.subr.mxu0 0.0
    %212 = vmatpush1.msra.mxu0 %v178
    %213 = vmatprep.subr.mxu0 0.0
    %214 = vmatpush1.msra.mxu0 %v179
    %215 = vmatprep.subr.mxu0 0.0
    %216 = vmatpush1.msra.mxu0 %v180
    %217 = vmatprep.subr.mxu0 0.0
    %218 = vmatpush1.msra.mxu0 0.0
    %219 = vmatprep.subr.mxu0 0.0
    %220 = vmatpush1.msra.mxu0 0.0
    %221 = vmatprep.subr.mxu0 0.0
    %222 = vmatpush1.msra.mxu0 0.0
    %223 = vmatprep.subr.mxu0 0.0
    %224 = vmatpush1.msra.mxu0 0.0
    %225 = vmatprep.subr.mxu0 0.0
    %226 = vmatpush1.msra.mxu0 0.0
    %227 = vmatprep.subr.mxu0 0.0
    %228 = vmatpush1.msra.mxu0 0.0
    %229 = vmatprep.subr.mxu0 0.0
    %230 = vmatpush1.msra.mxu0 0.0
    %231 = vmatprep.subr.mxu0 0.0
    %232 = vmatpush1.msra.mxu0 0.0
    %233 = vmatprep.subr.mxu0 0.0
    %234 = vmatpush1.msra.mxu0 0.0
    %235 = vmatprep.subr.mxu0 0.0
    %236 = vmatpush1.msra.mxu0 0.0
    %237 = vmatprep.subr.mxu0 0.0
    %238 = vmatpush1.msra.mxu0 0.0
    %239 = vmatprep.subr.mxu0 0.0
    %240 = vmatpush1.msra.mxu0 0.0
    %241 = vmatprep.subr.mxu0 0.0
    %242 = vmatpush1.msra.mxu0 0.0
    %243 = vmatprep.subr.mxu0 0.0
    %244 = vmatpush1.msra.mxu0 0.0
    %245 = vmatprep.subr.mxu0 0.0
    %246 = vmatpush1.msra.mxu0 0.0
    %247 = vmatprep.subr.mxu0 0.0
    %248 = vmatpush1.msra.mxu0 0.0
    %249 = vmatprep.mubr.f32.mxu0 0.0
    %250 = vmatmul.mubr.f32.gmra.mrb[0].mxu0 %v163
    %v251 = vpop.f32.mrb[0].mxu0
    %v252 = vadd.f32 %v183, %v251
    %v253 = vpop.f32.mrb[0].mxu0
    %254 = vdwg.mxu0
    %v255 = vmax.f32 %v159, %v252
    %v256 = vsub.f32 %v159, %v255
    %v257 = vmul.f32 %v256, 1.442695
    %v258 = vpow.pop %v257
    %v259 = vsub.f32 %v252, %v255
    %v260 = vmul.f32 %v259, 1.442695
    %v261 = vpow.pop %v260
    %v262 = vadd.f32 %v258, %v261
    %vm263 = vcmask 31744
    %v265 = vsel %vm263, %v258, 0
    %vm267 = vcmask 1043456
    %v269 = vsel %vm267, %v70, 0
    %271 = vmatprep.subr.mxu0 0.0
    %272 = vmatpush1.msra.mxu0 %v269
    %273 = vmatprep.subr.mxu0 0.0
    %274 = vmatpush1.msra.mxu0 0.0
    %275 = vmatprep.subr.mxu0 0.0
    %276 = vmatpush1.msra.mxu0 0.0
    %277 = vmatprep.subr.mxu0 0.0
    %278 = vmatpush1.msra.mxu0 0.0
    %279 = vmatprep.subr.mxu0 0.0
    %280 = vmatpush1.msra.mxu0 0.0
    %281 = vmatprep.subr.mxu0 0.0
    %282 = vmatpush1.msra.mxu0 0.0
    %283 = vmatprep.subr.mxu0 0.0
    %284 = vmatpush1.msra.mxu0 0.0
    %285 = vmatprep.subr.mxu0 0.0
    %286 = vmatpush1.msra.mxu0 0.0
    %287 = vmatprep.subr.mxu0 0.0
    %288 = vmatpush1.msra.mxu0 0.0
    %289 = vmatprep.subr.mxu0 0.0
    %290 = vmatpush1.msra.mxu0 0.0
    %291 = vmatprep.subr.mxu0 0.0
    %292 = vmatpush1.msra.mxu0 0.0
    %293 = vmatprep.subr.mxu0 0.0
    %294 = vmatpush1.msra.mxu0 0.0
    %295 = vmatprep.subr.mxu0 0.0
    %296 = vmatpush1.msra.mxu0 0.0
    %297 = vmatprep.subr.mxu0 0.0
    %298 = vmatpush1.msra.mxu0 0.0
    %299 = vmatprep.subr.mxu0 0.0
    %300 = vmatpush1.msra.mxu0 0.0
    %301 = vmatprep.subr.mxu0 0.0
    %302 = vmatpush1.msra.mxu0 0.0
    %303 = vmatprep.subr.mxu0 0.0
    %304 = vmatpush1.msra.mxu0 0.0
    %305 = vmatprep.subr.mxu0 0.0
    %306 = vmatpush1.msra.mxu0 0.0
    %307 = vmatprep.subr.mxu0 0.0
    %308 = vmatpush1.msra.mxu0 0.0
    %309 = vmatprep.subr.mxu0 0.0
    %310 = vmatpush1.msra.mxu0 0.0
    %311 = vmatprep.subr.mxu0 0.0
    %312 = vmatpush1.msra.mxu0 0.0
    %313 = vmatprep.subr.mxu0 0.0
    %314 = vmatpush1.msra.mxu0 0.0
    %315 = vmatprep.subr.mxu0 0.0
    %316 = vmatpush1.msra.mxu0 0.0
    %317 = vmatprep.subr.mxu0 0.0
    %318 = vmatpush1.msra.mxu0 0.0
    %319 = vmatprep.subr.mxu0 0.0
    %320 = vmatpush1.msra.mxu0 0.0
    %321 = vmatprep.subr.mxu0 0.0
    %322 = vmatpush1.msra.mxu0 0.0
    %323 = vmatprep.subr.mxu0 0.0
    %324 = vmatpush1.msra.mxu0 0.0
    %325 = vmatprep.subr.mxu0 0.0
    %326 = vmatpush1.msra.mxu0 0.0
    %327 = vmatprep.subr.mxu0 0.0
    %328 = vmatpush1.msra.mxu0 0.0
    %329 = vmatprep.subr.mxu0 0.0
    %330 = vmatpush1.msra.mxu0 0.0
    %331 = vmatprep.subr.mxu0 0.0
    %332 = vmatpush1.msra.mxu0 0.0
    %333 = vmatprep.subr.mxu0 0.0
    %334 = vmatpush1.msra.mxu0 0.0
    %335 = vmatprep.mubr.f32.mxu0 0.0
    %336 = vmatmul.mubr.f32.gmra.mrb[0].mxu0 %v265
    %v337 = vpop.f32.mrb[0].mxu0
    %v338 = vadd.f32 0.0, %v337
    %v339 = vpop.f32.mrb[0].mxu0
    %340 = vdwg.mxu0
    %v341 = vmul.f32 %v71, %v338
    %v343 = vsel %vm263, %v261, 0
    %345 = vmatprep.subr.mxu0 0.0
    %346 = vmatpush1.msra.mxu0 %v269
    %347 = vmatprep.subr.mxu0 0.0
    %348 = vmatpush1.msra.mxu0 0.0
    %349 = vmatprep.subr.mxu0 0.0
    %350 = vmatpush1.msra.mxu0 0.0
    %351 = vmatprep.subr.mxu0 0.0
    %352 = vmatpush1.msra.mxu0 0.0
    %353 = vmatprep.subr.mxu0 0.0
    %354 = vmatpush1.msra.mxu0 0.0
    %355 = vmatprep.subr.mxu0 0.0
    %356 = vmatpush1.msra.mxu0 0.0
    %357 = vmatprep.subr.mxu0 0.0
    %358 = vmatpush1.msra.mxu0 0.0
    %359 = vmatprep.subr.mxu0 0.0
    %360 = vmatpush1.msra.mxu0 0.0
    %361 = vmatprep.subr.mxu0 0.0
    %362 = vmatpush1.msra.mxu0 0.0
    %363 = vmatprep.subr.mxu0 0.0
    %364 = vmatpush1.msra.mxu0 0.0
    %365 = vmatprep.subr.mxu0 0.0
    %366 = vmatpush1.msra.mxu0 0.0
    %367 = vmatprep.subr.mxu0 0.0
    %368 = vmatpush1.msra.mxu0 0.0
    %369 = vmatprep.subr.mxu0 0.0
    %370 = vmatpush1.msra.mxu0 0.0
    %371 = vmatprep.subr.mxu0 0.0
    %372 = vmatpush1.msra.mxu0 0.0
    %373 = vmatprep.subr.mxu0 0.0
    %374 = vmatpush1.msra.mxu0 0.0
    %375 = vmatprep.subr.mxu0 0.0
    %376 = vmatpush1.msra.mxu0 0.0
    %377 = vmatprep.subr.mxu0 0.0
    %378 = vmatpush1.msra.mxu0 0.0
    %379 = vmatprep.subr.mxu0 0.0
    %380 = vmatpush1.msra.mxu0 0.0
    %381 = vmatprep.subr.mxu0 0.0
    %382 = vmatpush1.msra.mxu0 0.0
    %383 = vmatprep.subr.mxu0 0.0
    %384 = vmatpush1.msra.mxu0 0.0
    %385 = vmatprep.subr.mxu0 0.0
    %386 = vmatpush1.msra.mxu0 0.0
    %387 = vmatprep.subr.mxu0 0.0
    %388 = vmatpush1.msra.mxu0 0.0
    %389 = vmatprep.subr.mxu0 0.0
    %390 = vmatpush1.msra.mxu0 0.0
    %391 = vmatprep.subr.mxu0 0.0
    %392 = vmatpush1.msra.mxu0 0.0
    %393 = vmatprep.subr.mxu0 0.0
    %394 = vmatpush1.msra.mxu0 0.0
    %395 = vmatprep.subr.mxu0 0.0
    %396 = vmatpush1.msra.mxu0 0.0
    %397 = vmatprep.subr.mxu0 0.0
    %398 = vmatpush1.msra.mxu0 0.0
    %399 = vmatprep.subr.mxu0 0.0
    %400 = vmatpush1.msra.mxu0 0.0
    %401 = vmatprep.subr.mxu0 0.0
    %402 = vmatpush1.msra.mxu0 0.0
    %403 = vmatprep.subr.mxu0 0.0
    %404 = vmatpush1.msra.mxu0 0.0
    %405 = vmatprep.subr.mxu0 0.0
    %406 = vmatpush1.msra.mxu0 0.0
    %407 = vmatprep.subr.mxu0 0.0
    %408 = vmatpush1.msra.mxu0 0.0
    %409 = vmatprep.mubr.f32.mxu0 0.0
    %410 = vmatmul.mubr.f32.gmra.mrb[0].mxu0 %v343
    %v411 = vpop.f32.mrb[0].mxu0
    %v412 = vadd.f32 0.0, %v411
    %v413 = vpop.f32.mrb[0].mxu0
    %414 = vdwg.mxu0
    %v415 = vmul.f32 %v163, %v412
    %v416 = vadd.f32 %v341, %v415
    %s417 = scalar_lea.vmem [#allocation2], 8
    %v418 = vld [vmem:[%s417] sm:$0xf]
    %s419 = scalar_lea.vmem [#allocation5], 256
    %v420 = vld [vmem:[%s419] sm:$0xff]
    %v421 = vld [vmem:[%s419 + $0x8] sm:$0xff]
    %v422 = vld [vmem:[%s419 + $0x10] sm:$0xff]
    %v423 = vld [vmem:[%s419 + $0x18] sm:$0xff]
    %v424 = vld [vmem:[%s419 + $0x20] sm:$0xff]
    %v425 = vld [vmem:[%s419 + $0x28] sm:$0xff]
    %v426 = vld [vmem:[%s419 + $0x30] sm:$0xff]
    %v427 = vld [vmem:[%s419 + $0x38] sm:$0xff]
    %v428 = vld [vmem:[%s419 + $0x40] sm:$0xff]
    %v429 = vld [vmem:[%s419 + $0x48] sm:$0xff]
    %v430 = vld [vmem:[%s419 + $0x50] sm:$0xff]
    %v431 = vld [vmem:[%s419 + $0x58] sm:$0xff]
    %v432 = vld [vmem:[%s419 + $0x60] sm:$0xff]
    %v433 = vld [vmem:[%s419 + $0x68] sm:$0xff]
    %v434 = vld [vmem:[%s419 + $0x70] sm:$0xff]
    %v435 = vld [vmem:[%s419 + $0x78] sm:$0xff]
    %v436 = vrot.slane %v69, 2
    %s437 = vtos %v436
    %v438 = vstv %s437
    %440 = vmatprep.subr.mxu0 0.0
    %441 = vmatpush1.msra.mxu0 %v420
    %442 = vmatprep.subr.mxu0 0.0
    %443 = vmatpush1.msra.mxu0 %v421
    %444 = vmatprep.subr.mxu0 0.0
    %445 = vmatpush1.msra.mxu0 %v422
    %446 = vmatprep.subr.mxu0 0.0
    %447 = vmatpush1.msra.mxu0 %v423
    %448 = vmatprep.subr.mxu0 0.0
    %449 = vmatpush1.msra.mxu0 %v424
    %450 = vmatprep.subr.mxu0 0.0
    %451 = vmatpush1.msra.mxu0 %v425
    %452 = vmatprep.subr.mxu0 0.0
    %453 = vmatpush1.msra.mxu0 %v426
    %454 = vmatprep.subr.mxu0 0.0
    %455 = vmatpush1.msra.mxu0 %v427
    %456 = vmatprep.subr.mxu0 0.0
    %457 = vmatpush1.msra.mxu0 %v428
    %458 = vmatprep.subr.mxu0 0.0
    %459 = vmatpush1.msra.mxu0 %v429
    %460 = vmatprep.subr.mxu0 0.0
    %461 = vmatpush1.msra.mxu0 %v430
    %462 = vmatprep.subr.mxu0 0.0
    %463 = vmatpush1.msra.mxu0 %v431
    %464 = vmatprep.subr.mxu0 0.0
    %465 = vmatpush1.msra.mxu0 %v432
    %466 = vmatprep.subr.mxu0 0.0
    %467 = vmatpush1.msra.mxu0 %v433
    %468 = vmatprep.subr.mxu0 0.0
    %469 = vmatpush1.msra.mxu0 %v434
    %470 = vmatprep.subr.mxu0 0.0
    %471 = vmatpush1.msra.mxu0 %v435
    %472 = vmatprep.subr.mxu0 0.0
    %473 = vmatpush1.msra.mxu0 0.0
    %474 = vmatprep.subr.mxu0 0.0
    %475 = vmatpush1.msra.mxu0 0.0
    %476 = vmatprep.subr.mxu0 0.0
    %477 = vmatpush1.msra.mxu0 0.0
    %478 = vmatprep.subr.mxu0 0.0
    %479 = vmatpush1.msra.mxu0 0.0
    %480 = vmatprep.subr.mxu0 0.0
    %481 = vmatpush1.msra.mxu0 0.0
    %482 = vmatprep.subr.mxu0 0.0
    %483 = vmatpush1.msra.mxu0 0.0
    %484 = vmatprep.subr.mxu0 0.0
    %485 = vmatpush1.msra.mxu0 0.0
    %486 = vmatprep.subr.mxu0 0.0
    %487 = vmatpush1.msra.mxu0 0.0
    %488 = vmatprep.subr.mxu0 0.0
    %489 = vmatpush1.msra.mxu0 0.0
    %490 = vmatprep.subr.mxu0 0.0
    %491 = vmatpush1.msra.mxu0 0.0
    %492 = vmatprep.subr.mxu0 0.0
    %493 = vmatpush1.msra.mxu0 0.0
    %494 = vmatprep.subr.mxu0 0.0
    %495 = vmatpush1.msra.mxu0 0.0
    %496 = vmatprep.subr.mxu0 0.0
    %497 = vmatpush1.msra.mxu0 0.0
    %498 = vmatprep.subr.mxu0 0.0
    %499 = vmatpush1.msra.mxu0 0.0
    %500 = vmatprep.subr.mxu0 0.0
    %501 = vmatpush1.msra.mxu0 0.0
    %502 = vmatprep.subr.mxu0 0.0
    %503 = vmatpush1.msra.mxu0 0.0
    %504 = vmatprep.mubr.f32.mxu0 0.0
    %505 = vmatmul.mubr.f32.gmra.mrb[0].mxu0 %v418
    %v506 = vpop.f32.mrb[0].mxu0
    %v507 = vadd.f32 %v438, %v506
    %v508 = vpop.f32.mrb[0].mxu0
    %509 = vdwg.mxu0
    %v510 = vmax.f32 %v255, %v507
    %v511 = vsub.f32 %v255, %v510
    %v512 = vmul.f32 %v511, 1.442695
    %v513 = vpow.pop %v512
    %v514 = vsub.f32 %v507, %v510
    %v515 = vmul.f32 %v514, 1.442695
    %v516 = vpow.pop %v515
    %v517 = vmul.f32 %v513, %v262
    %v518 = vadd.f32 %v517, %v516
    %v520 = vsel %vm263, %v513, 0
    %522 = vmatprep.subr.mxu0 0.0
    %523 = vmatpush1.msra.mxu0 %v269
    %524 = vmatprep.subr.mxu0 0.0
    %525 = vmatpush1.msra.mxu0 0.0
    %526 = vmatprep.subr.mxu0 0.0
    %527 = vmatpush1.msra.mxu0 0.0
    %528 = vmatprep.subr.mxu0 0.0
    %529 = vmatpush1.msra.mxu0 0.0
    %530 = vmatprep.subr.mxu0 0.0
    %531 = vmatpush1.msra.mxu0 0.0
    %532 = vmatprep.subr.mxu0 0.0
    %533 = vmatpush1.msra.mxu0 0.0
    %534 = vmatprep.subr.mxu0 0.0
    %535 = vmatpush1.msra.mxu0 0.0
    %536 = vmatprep.subr.mxu0 0.0
    %537 = vmatpush1.msra.mxu0 0.0
    %538 = vmatprep.subr.mxu0 0.0
    %539 = vmatpush1.msra.mxu0 0.0
    %540 = vmatprep.subr.mxu0 0.0
    %541 = vmatpush1.msra.mxu0 0.0
    %542 = vmatprep.subr.mxu0 0.0
    %543 = vmatpush1.msra.mxu0 0.0
    %544 = vmatprep.subr.mxu0 0.0
    %545 = vmatpush1.msra.mxu0 0.0
    %546 = vmatprep.subr.mxu0 0.0
    %547 = vmatpush1.msra.mxu0 0.0
    %548 = vmatprep.subr.mxu0 0.0
    %549 = vmatpush1.msra.mxu0 0.0
    %550 = vmatprep.subr.mxu0 0.0
    %551 = vmatpush1.msra.mxu0 0.0
    %552 = vmatprep.subr.mxu0 0.0
    %553 = vmatpush1.msra.mxu0 0.0
    %554 = vmatprep.subr.mxu0 0.0
    %555 = vmatpush1.msra.mxu0 0.0
    %556 = vmatprep.subr.mxu0 0.0
    %557 = vmatpush1.msra.mxu0 0.0
    %558 = vmatprep.subr.mxu0 0.0
    %559 = vmatpush1.msra.mxu0 0.0
    %560 = vmatprep.subr.mxu0 0.0
    %561 = vmatpush1.msra.mxu0 0.0
    %562 = vmatprep.subr.mxu0 0.0
    %563 = vmatpush1.msra.mxu0 0.0
    %564 = vmatprep.subr.mxu0 0.0
    %565 = vmatpush1.msra.mxu0 0.0
    %566 = vmatprep.subr.mxu0 0.0
    %567 = vmatpush1.msra.mxu0 0.0
    %568 = vmatprep.subr.mxu0 0.0
    %569 = vmatpush1.msra.mxu0 0.0
    %570 = vmatprep.subr.mxu0 0.0
    %571 = vmatpush1.msra.mxu0 0.0
    %572 = vmatprep.subr.mxu0 0.0
    %573 = vmatpush1.msra.mxu0 0.0
    %574 = vmatprep.subr.mxu0 0.0
    %575 = vmatpush1.msra.mxu0 0.0
    %576 = vmatprep.subr.mxu0 0.0
    %577 = vmatpush1.msra.mxu0 0.0
    %578 = vmatprep.subr.mxu0 0.0
    %579 = vmatpush1.msra.mxu0 0.0
    %580 = vmatprep.subr.mxu0 0.0
    %581 = vmatpush1.msra.mxu0 0.0
    %582 = vmatprep.subr.mxu0 0.0
    %583 = vmatpush1.msra.mxu0 0.0
    %584 = vmatprep.subr.mxu0 0.0
    %585 = vmatpush1.msra.mxu0 0.0
    %586 = vmatprep.mubr.f32.mxu0 0.0
    %587 = vmatmul.mubr.f32.gmra.mrb[0].mxu0 %v520
    %v588 = vpop.f32.mrb[0].mxu0
    %v589 = vadd.f32 0.0, %v588
    %v590 = vpop.f32.mrb[0].mxu0
    %591 = vdwg.mxu0
    %v592 = vmul.f32 %v416, %v589
    %v594 = vsel %vm263, %v516, 0
    %596 = vmatprep.subr.mxu0 0.0
    %597 = vmatpush1.msra.mxu0 %v269
    %598 = vmatprep.subr.mxu0 0.0
    %599 = vmatpush1.msra.mxu0 0.0
    %600 = vmatprep.subr.mxu0 0.0
    %601 = vmatpush1.msra.mxu0 0.0
    %602 = vmatprep.subr.mxu0 0.0
    %603 = vmatpush1.msra.mxu0 0.0
    %604 = vmatprep.subr.mxu0 0.0
    %605 = vmatpush1.msra.mxu0 0.0
    %606 = vmatprep.subr.mxu0 0.0
    %607 = vmatpush1.msra.mxu0 0.0
    %608 = vmatprep.subr.mxu0 0.0
    %609 = vmatpush1.msra.mxu0 0.0
    %610 = vmatprep.subr.mxu0 0.0
    %611 = vmatpush1.msra.mxu0 0.0
    %612 = vmatprep.subr.mxu0 0.0
    %613 = vmatpush1.msra.mxu0 0.0
    %614 = vmatprep.subr.mxu0 0.0
    %615 = vmatpush1.msra.mxu0 0.0
    %616 = vmatprep.subr.mxu0 0.0
    %617 = vmatpush1.msra.mxu0 0.0
    %618 = vmatprep.subr.mxu0 0.0
    %619 = vmatpush1.msra.mxu0 0.0
    %620 = vmatprep.subr.mxu0 0.0
    %621 = vmatpush1.msra.mxu0 0.0
    %622 = vmatprep.subr.mxu0 0.0
    %623 = vmatpush1.msra.mxu0 0.0
    %624 = vmatprep.subr.mxu0 0.0
    %625 = vmatpush1.msra.mxu0 0.0
    %626 = vmatprep.subr.mxu0 0.0
    %627 = vmatpush1.msra.mxu0 0.0
    %628 = vmatprep.subr.mxu0 0.0
    %629 = vmatpush1.msra.mxu0 0.0
    %630 = vmatprep.subr.mxu0 0.0
    %631 = vmatpush1.msra.mxu0 0.0
    %632 = vmatprep.subr.mxu0 0.0
    %633 = vmatpush1.msra.mxu0 0.0
    %634 = vmatprep.subr.mxu0 0.0
    %635 = vmatpush1.msra.mxu0 0.0
    %636 = vmatprep.subr.mxu0 0.0
    %637 = vmatpush1.msra.mxu0 0.0
    %638 = vmatprep.subr.mxu0 0.0
    %639 = vmatpush1.msra.mxu0 0.0
    %640 = vmatprep.subr.mxu0 0.0
    %641 = vmatpush1.msra.mxu0 0.0
    %642 = vmatprep.subr.mxu0 0.0
    %643 = vmatpush1.msra.mxu0 0.0
    %644 = vmatprep.subr.mxu0 0.0
    %645 = vmatpush1.msra.mxu0 0.0
    %646 = vmatprep.subr.mxu0 0.0
    %647 = vmatpush1.msra.mxu0 0.0
    %648 = vmatprep.subr.mxu0 0.0
    %649 = vmatpush1.msra.mxu0 0.0
    %650 = vmatprep.subr.mxu0 0.0
    %651 = vmatpush1.msra.mxu0 0.0
    %652 = vmatprep.subr.mxu0 0.0
    %653 = vmatpush1.msra.mxu0 0.0
    %654 = vmatprep.subr.mxu0 0.0
    %655 = vmatpush1.msra.mxu0 0.0
    %656 = vmatprep.subr.mxu0 0.0
    %657 = vmatpush1.msra.mxu0 0.0
    %658 = vmatprep.subr.mxu0 0.0
    %659 = vmatpush1.msra.mxu0 0.0
    %660 = vmatprep.mubr.f32.mxu0 0.0
    %661 = vmatmul.mubr.f32.gmra.mrb[0].mxu0 %v594
    %v662 = vpop.f32.mrb[0].mxu0
    %v663 = vadd.f32 0.0, %v662
    %v664 = vpop.f32.mrb[0].mxu0
    %665 = vdwg.mxu0
    %v666 = vmul.f32 %v418, %v663
    %v667 = vadd.f32 %v592, %v666
    %s668 = scalar_lea.vmem [#allocation2], 12
    %v669 = vld [vmem:[%s668] sm:$0xf]
    %s670 = scalar_lea.vmem [#allocation5], 384
    %v671 = vld [vmem:[%s670] sm:$0xff]
    %v672 = vld [vmem:[%s670 + $0x8] sm:$0xff]
    %v673 = vld [vmem:[%s670 + $0x10] sm:$0xff]
    %v674 = vld [vmem:[%s670 + $0x18] sm:$0xff]
    %v675 = vld [vmem:[%s670 + $0x20] sm:$0xff]
    %v676 = vld [vmem:[%s670 + $0x28] sm:$0xff]
    %v677 = vld [vmem:[%s670 + $0x30] sm:$0xff]
    %v678 = vld [vmem:[%s670 + $0x38] sm:$0xff]
    %v679 = vld [vmem:[%s670 + $0x40] sm:$0xff]
    %v680 = vld [vmem:[%s670 + $0x48] sm:$0xff]
    %v681 = vld [vmem:[%s670 + $0x50] sm:$0xff]
    %v682 = vld [vmem:[%s670 + $0x58] sm:$0xff]
    %v683 = vld [vmem:[%s670 + $0x60] sm:$0xff]
    %v684 = vld [vmem:[%s670 + $0x68] sm:$0xff]
    %v685 = vld [vmem:[%s670 + $0x70] sm:$0xff]
    %v686 = vld [vmem:[%s670 + $0x78] sm:$0xff]
    %v687 = vrot.slane %v69, 3
    %s688 = vtos %v687
    %v689 = vstv %s688
    %691 = vmatprep.subr.mxu0 0.0
    %692 = vmatpush1.msra.mxu0 %v671
    %693 = vmatprep.subr.mxu0 0.0
    %694 = vmatpush1.msra.mxu0 %v672
    %695 = vmatprep.subr.mxu0 0.0
    %696 = vmatpush1.msra.mxu0 %v673
    %697 = vmatprep.subr.mxu0 0.0
    %698 = vmatpush1.msra.mxu0 %v674
    %699 = vmatprep.subr.mxu0 0.0
    %700 = vmatpush1.msra.mxu0 %v675
    %701 = vmatprep.subr.mxu0 0.0
    %702 = vmatpush1.msra.mxu0 %v676
    %703 = vmatprep.subr.mxu0 0.0
    %704 = vmatpush1.msra.mxu0 %v677
    %705 = vmatprep.subr.mxu0 0.0
    %706 = vmatpush1.msra.mxu0 %v678
    %707 = vmatprep.subr.mxu0 0.0
    %708 = vmatpush1.msra.mxu0 %v679
    %709 = vmatprep.subr.mxu0 0.0
    %710 = vmatpush1.msra.mxu0 %v680
    %711 = vmatprep.subr.mxu0 0.0
    %712 = vmatpush1.msra.mxu0 %v681
    %713 = vmatprep.subr.mxu0 0.0
    %714 = vmatpush1.msra.mxu0 %v682
    %715 = vmatprep.subr.mxu0 0.0
    %716 = vmatpush1.msra.mxu0 %v683
    %717 = vmatprep.subr.mxu0 0.0
    %718 = vmatpush1.msra.mxu0 %v684
    %719 = vmatprep.subr.mxu0 0.0
    %720 = vmatpush1.msra.mxu0 %v685
    %721 = vmatprep.subr.mxu0 0.0
    %722 = vmatpush1.msra.mxu0 %v686
    %723 = vmatprep.subr.mxu0 0.0
    %724 = vmatpush1.msra.mxu0 0.0
    %725 = vmatprep.subr.mxu0 0.0
    %726 = vmatpush1.msra.mxu0 0.0
    %727 = vmatprep.subr.mxu0 0.0
    %728 = vmatpush1.msra.mxu0 0.0
    %729 = vmatprep.subr.mxu0 0.0
    %730 = vmatpush1.msra.mxu0 0.0
    %731 = vmatprep.subr.mxu0 0.0
    %732 = vmatpush1.msra.mxu0 0.0
    %733 = vmatprep.subr.mxu0 0.0
    %734 = vmatpush1.msra.mxu0 0.0
    %735 = vmatprep.subr.mxu0 0.0
    %736 = vmatpush1.msra.mxu0 0.0
    %737 = vmatprep.subr.mxu0 0.0
    %738 = vmatpush1.msra.mxu0 0.0
    %739 = vmatprep.subr.mxu0 0.0
    %740 = vmatpush1.msra.mxu0 0.0
    %741 = vmatprep.subr.mxu0 0.0
    %742 = vmatpush1.msra.mxu0 0.0
    %743 = vmatprep.subr.mxu0 0.0
    %744 = vmatpush1.msra.mxu0 0.0
    %745 = vmatprep.subr.mxu0 0.0
    %746 = vmatpush1.msra.mxu0 0.0
    %747 = vmatprep.subr.mxu0 0.0
    %748 = vmatpush1.msra.mxu0 0.0
    %749 = vmatprep.subr.mxu0 0.0
    %750 = vmatpush1.msra.mxu0 0.0
    %751 = vmatprep.subr.mxu0 0.0
    %752 = vmatpush1.msra.mxu0 0.0
    %753 = vmatprep.subr.mxu0 0.0
    %754 = vmatpush1.msra.mxu0 0.0
    %755 = vmatprep.mubr.f32.mxu0 0.0
    %756 = vmatmul.mubr.f32.gmra.mrb[0].mxu0 %v669
    %v757 = vpop.f32.mrb[0].mxu0
    %v758 = vadd.f32 %v689, %v757
    %v759 = vpop.f32.mrb[0].mxu0
    %760 = vdwg.mxu0
    %v761 = vmax.f32 %v510, %v758
    %v762 = vsub.f32 %v510, %v761
    %v763 = vmul.f32 %v762, 1.442695
    %v764 = vpow.pop %v763
    %v765 = vsub.f32 %v758, %v761
    %v766 = vmul.f32 %v765, 1.442695
    %v767 = vpow.pop %v766
    %v768 = vmul.f32 %v764, %v518
    %v769 = vadd.f32 %v768, %v767
    %v771 = vsel %vm263, %v764, 0
    %773 = vmatprep.subr.mxu0 0.0
    %774 = vmatpush1.msra.mxu0 %v269
    %775 = vmatprep.subr.mxu0 0.0
    %776 = vmatpush1.msra.mxu0 0.0
    %777 = vmatprep.subr.mxu0 0.0
    %778 = vmatpush1.msra.mxu0 0.0
    %779 = vmatprep.subr.mxu0 0.0
    %780 = vmatpush1.msra.mxu0 0.0
    %781 = vmatprep.subr.mxu0 0.0
    %782 = vmatpush1.msra.mxu0 0.0
    %783 = vmatprep.subr.mxu0 0.0
    %784 = vmatpush1.msra.mxu0 0.0
    %785 = vmatprep.subr.mxu0 0.0
    %786 = vmatpush1.msra.mxu0 0.0
    %787 = vmatprep.subr.mxu0 0.0
    %788 = vmatpush1.msra.mxu0 0.0
    %789 = vmatprep.subr.mxu0 0.0
    %790 = vmatpush1.msra.mxu0 0.0
    %791 = vmatprep.subr.mxu0 0.0
    %792 = vmatpush1.msra.mxu0 0.0
    %793 = vmatprep.subr.mxu0 0.0
    %794 = vmatpush1.msra.mxu0 0.0
    %795 = vmatprep.subr.mxu0 0.0
    %796 = vmatpush1.msra.mxu0 0.0
    %797 = vmatprep.subr.mxu0 0.0
    %798 = vmatpush1.msra.mxu0 0.0
    %799 = vmatprep.subr.mxu0 0.0
    %800 = vmatpush1.msra.mxu0 0.0
    %801 = vmatprep.subr.mxu0 0.0
    %802 = vmatpush1.msra.mxu0 0.0
    %803 = vmatprep.subr.mxu0 0.0
    %804 = vmatpush1.msra.mxu0 0.0
    %805 = vmatprep.subr.mxu0 0.0
    %806 = vmatpush1.msra.mxu0 0.0
    %807 = vmatprep.subr.mxu0 0.0
    %808 = vmatpush1.msra.mxu0 0.0
    %809 = vmatprep.subr.mxu0 0.0
    %810 = vmatpush1.msra.mxu0 0.0
    %811 = vmatprep.subr.mxu0 0.0
    %812 = vmatpush1.msra.mxu0 0.0
    %813 = vmatprep.subr.mxu0 0.0
    %814 = vmatpush1.msra.mxu0 0.0
    %815 = vmatprep.subr.mxu0 0.0
    %816 = vmatpush1.msra.mxu0 0.0
    %817 = vmatprep.subr.mxu0 0.0
    %818 = vmatpush1.msra.mxu0 0.0
    %819 = vmatprep.subr.mxu0 0.0
    %820 = vmatpush1.msra.mxu0 0.0
    %821 = vmatprep.subr.mxu0 0.0
    %822 = vmatpush1.msra.mxu0 0.0
    %823 = vmatprep.subr.mxu0 0.0
    %824 = vmatpush1.msra.mxu0 0.0
    %825 = vmatprep.subr.mxu0 0.0
    %826 = vmatpush1.msra.mxu0 0.0
    %827 = vmatprep.subr.mxu0 0.0
    %828 = vmatpush1.msra.mxu0 0.0
    %829 = vmatprep.subr.mxu0 0.0
    %830 = vmatpush1.msra.mxu0 0.0
    %831 = vmatprep.subr.mxu0 0.0
    %832 = vmatpush1.msra.mxu0 0.0
    %833 = vmatprep.subr.mxu0 0.0
    %834 = vmatpush1.msra.mxu0 0.0
    %835 = vmatprep.subr.mxu0 0.0
    %836 = vmatpush1.msra.mxu0 0.0
    %837 = vmatprep.mubr.f32.mxu0 0.0
    %838 = vmatmul.mubr.f32.gmra.mrb[0].mxu0 %v771
    %v839 = vpop.f32.mrb[0].mxu0
    %v840 = vadd.f32 0.0, %v839
    %v841 = vpop.f32.mrb[0].mxu0
    %842 = vdwg.mxu0
    %v843 = vmul.f32 %v667, %v840
    %v845 = vsel %vm263, %v767, 0
    %847 = vmatprep.subr.mxu0 0.0
    %848 = vmatpush1.msra.mxu0 %v269
    %849 = vmatprep.subr.mxu0 0.0
    %850 = vmatpush1.msra.mxu0 0.0
    %851 = vmatprep.subr.mxu0 0.0
    %852 = vmatpush1.msra.mxu0 0.0
    %853 = vmatprep.subr.mxu0 0.0
    %854 = vmatpush1.msra.mxu0 0.0
    %855 = vmatprep.subr.mxu0 0.0
    %856 = vmatpush1.msra.mxu0 0.0
    %857 = vmatprep.subr.mxu0 0.0
    %858 = vmatpush1.msra.mxu0 0.0
    %859 = vmatprep.subr.mxu0 0.0
    %860 = vmatpush1.msra.mxu0 0.0
    %861 = vmatprep.subr.mxu0 0.0
    %862 = vmatpush1.msra.mxu0 0.0
    %863 = vmatprep.subr.mxu0 0.0
    %864 = vmatpush1.msra.mxu0 0.0
    %865 = vmatprep.subr.mxu0 0.0
    %866 = vmatpush1.msra.mxu0 0.0
    %867 = vmatprep.subr.mxu0 0.0
    %868 = vmatpush1.msra.mxu0 0.0
    %869 = vmatprep.subr.mxu0 0.0
    %870 = vmatpush1.msra.mxu0 0.0
    %871 = vmatprep.subr.mxu0 0.0
    %872 = vmatpush1.msra.mxu0 0.0
    %873 = vmatprep.subr.mxu0 0.0
    %874 = vmatpush1.msra.mxu0 0.0
    %875 = vmatprep.subr.mxu0 0.0
    %876 = vmatpush1.msra.mxu0 0.0
    %877 = vmatprep.subr.mxu0 0.0
    %878 = vmatpush1.msra.mxu0 0.0
    %879 = vmatprep.subr.mxu0 0.0
    %880 = vmatpush1.msra.mxu0 0.0
    %881 = vmatprep.subr.mxu0 0.0
    %882 = vmatpush1.msra.mxu0 0.0
    %883 = vmatprep.subr.mxu0 0.0
    %884 = vmatpush1.msra.mxu0 0.0
    %885 = vmatprep.subr.mxu0 0.0
    %886 = vmatpush1.msra.mxu0 0.0
    %887 = vmatprep.subr.mxu0 0.0
    %888 = vmatpush1.msra.mxu0 0.0
    %889 = vmatprep.subr.mxu0 0.0
    %890 = vmatpush1.msra.mxu0 0.0
    %891 = vmatprep.subr.mxu0 0.0
    %892 = vmatpush1.msra.mxu0 0.0
    %893 = vmatprep.subr.mxu0 0.0
    %894 = vmatpush1.msra.mxu0 0.0
    %895 = vmatprep.subr.mxu0 0.0
    %896 = vmatpush1.msra.mxu0 0.0
    %897 = vmatprep.subr.mxu0 0.0
    %898 = vmatpush1.msra.mxu0 0.0
    %899 = vmatprep.subr.mxu0 0.0
    %900 = vmatpush1.msra.mxu0 0.0
    %901 = vmatprep.subr.mxu0 0.0
    %902 = vmatpush1.msra.mxu0 0.0
    %903 = vmatprep.subr.mxu0 0.0
    %904 = vmatpush1.msra.mxu0 0.0
    %905 = vmatprep.subr.mxu0 0.0
    %906 = vmatpush1.msra.mxu0 0.0
    %907 = vmatprep.subr.mxu0 0.0
    %908 = vmatpush1.msra.mxu0 0.0
    %909 = vmatprep.subr.mxu0 0.0
    %910 = vmatpush1.msra.mxu0 0.0
    %911 = vmatprep.mubr.f32.mxu0 0.0
    %912 = vmatmul.mubr.f32.gmra.mrb[0].mxu0 %v845
    %v913 = vpop.f32.mrb[0].mxu0
    %v914 = vadd.f32 0.0, %v913
    %v915 = vpop.f32.mrb[0].mxu0
    %916 = vdwg.mxu0
    %v917 = vmul.f32 %v669, %v914
    %v918 = vadd.f32 %v843, %v917
    %v919 = vrcp.pop %v769
    %v920 = vmul.f32 1.0, %v919
    %v922 = vsel %vm263, %v920, 0
    %924 = vmatprep.subr.mxu0 0.0
    %925 = vmatpush1.msra.mxu0 %v269
    %926 = vmatprep.subr.mxu0 0.0
    %927 = vmatpush1.msra.mxu0 0.0
    %928 = vmatprep.subr.mxu0 0.0
    %929 = vmatpush1.msra.mxu0 0.0
    %930 = vmatprep.subr.mxu0 0.0
    %931 = vmatpush1.msra.mxu0 0.0
    %932 = vmatprep.subr.mxu0 0.0
    %933 = vmatpush1.msra.mxu0 0.0
    %934 = vmatprep.subr.mxu0 0.0
    %935 = vmatpush1.msra.mxu0 0.0
    %936 = vmatprep.subr.mxu0 0.0
    %937 = vmatpush1.msra.mxu0 0.0
    %938 = vmatprep.subr.mxu0 0.0
    %939 = vmatpush1.msra.mxu0 0.0
    %940 = vmatprep.subr.mxu0 0.0
    %941 = vmatpush1.msra.mxu0 0.0
    %942 = vmatprep.subr.mxu0 0.0
    %943 = vmatpush1.msra.mxu0 0.0
    %944 = vmatprep.subr.mxu0 0.0
    %945 = vmatpush1.msra.mxu0 0.0
    %946 = vmatprep.subr.mxu0 0.0
    %947 = vmatpush1.msra.mxu0 0.0
    %948 = vmatprep.subr.mxu0 0.0
    %949 = vmatpush1.msra.mxu0 0.0
    %950 = vmatprep.subr.mxu0 0.0
    %951 = vmatpush1.msra.mxu0 0.0
    %952 = vmatprep.subr.mxu0 0.0
    %953 = vmatpush1.msra.mxu0 0.0
    %954 = vmatprep.subr.mxu0 0.0
    %955 = vmatpush1.msra.mxu0 0.0
    %956 = vmatprep.subr.mxu0 0.0
    %957 = vmatpush1.msra.mxu0 0.0
    %958 = vmatprep.subr.mxu0 0.0
    %959 = vmatpush1.msra.mxu0 0.0
    %960 = vmatprep.subr.mxu0 0.0
    %961 = vmatpush1.msra.mxu0 0.0
    %962 = vmatprep.subr.mxu0 0.0
    %963 = vmatpush1.msra.mxu0 0.0
    %964 = vmatprep.subr.mxu0 0.0
    %965 = vmatpush1.msra.mxu0 0.0
    %966 = vmatprep.subr.mxu0 0.0
    %967 = vmatpush1.msra.mxu0 0.0
    %968 = vmatprep.subr.mxu0 0.0
    %969 = vmatpush1.msra.mxu0 0.0
    %970 = vmatprep.subr.mxu0 0.0
    %971 = vmatpush1.msra.mxu0 0.0
    %972 = vmatprep.subr.mxu0 0.0
    %973 = vmatpush1.msra.mxu0 0.0
    %974 = vmatprep.subr.mxu0 0.0
    %975 = vmatpush1.msra.mxu0 0.0
    %976 = vmatprep.subr.mxu0 0.0
    %977 = vmatpush1.msra.mxu0 0.0
    %978 = vmatprep.subr.mxu0 0.0
    %979 = vmatpush1.msra.mxu0 0.0
    %980 = vmatprep.subr.mxu0 0.0
    %981 = vmatpush1.msra.mxu0 0.0
    %982 = vmatprep.subr.mxu0 0.0
    %983 = vmatpush1.msra.mxu0 0.0
    %984 = vmatprep.subr.mxu0 0.0
    %985 = vmatpush1.msra.mxu0 0.0
    %986 = vmatprep.subr.mxu0 0.0
    %987 = vmatpush1.msra.mxu0 0.0
    %988 = vmatprep.mubr.f32.mxu0 0.0
    %989 = vmatmul.mubr.f32.gmra.mrb[0].mxu0 %v922
    %v990 = vpop.f32.mrb[0].mxu0
    %v991 = vadd.f32 0.0, %v990
    %v992 = vpop.f32.mrb[0].mxu0
    %993 = vdwg.mxu0
    %v994 = vmul.f32 %v918, %v991
    %995 = vst [vmem:[#allocation10] sm:$0xf] %v994
    // Predicated region
    $region34: #{tpu_custom_call.1} parent=1 // pred_check
      _
    $region35: #{tpu_custom_call.1} parent=1 // pred_check_branch
      %997 = sbr.rel (0) target = $region37
    $region36: #{tpu_custom_call.1} parent=1 // pred_region
      %s999 = ssub.s32 64, 64
      %1000 = vsyncadd [#allocation4], %s999
      %s1002 = sshll.u32 [#allocation10], 4
      %s1003 = int_to_ptr.vmem [resolvable:$true] %s1002
      %1005 = dma.vmem_to_hbm [thread:$0]  %s1003, 64, %s4, [#allocation4]
    $region37: #{tpu_custom_call.1} parent=1 // pred_fallthru
      _
    // Predicated region
    $region38: #{tpu_custom_call.1} parent=1 // pred_check
      _
    $region39: #{tpu_custom_call.1} parent=1 // pred_check_branch
      %1007 = sbr.rel (0) target = $region41
    $region40: #{tpu_custom_call.1} parent=1 // pred_region
      %1008 = dma.done [#allocation4], 64
    $region41: #{tpu_custom_call.1} parent=1 // pred_fallthru
      _
    %1009 = vsyncpa [#allocation3], 1
    %1010 = vsyncpa [#allocation6], 1
    %1011 = vsyncpa [#allocation9], 1
    %1012 = vsyncpa [#allocation4], 1

</llo_original>
